<compile_context>
chip_gen: v5e
topology: v5e:2x2
jax: 0.10.0
libtpu: 0.0.40
codegen_flags: <defaults>
</compile_context>

<pallas_src>
import jax
import jax.numpy as jnp
from jax.experimental import pallas as pl
from jax.experimental.pallas import tpu as pltpu

HIDDEN_BERT = 768           # BERT hidden size
EMB_DIM = 256               # nn.Embedding(28592, 256)
VOCAB = 28592
H1 = 256
H2 = 64                     # logical second hidden size
H2P = 128                   # lane-padded second hidden size
OUT = 3
OUT_PAD = 128               # lane-dense padded output width
BN_EPS = 1e-5

# TODO(synk): the BERT encoder itself (AutoModel.from_pretrained) has no clean Pallas
# equivalent here; its last_hidden_state is taken as an input.


def fused_kernel(pooled_ref,                  # [B, 768]  bf16  (CLS token)
                 emb_ref,                     # [B, 256]  bf16  (gathered publisher rows)
                 w1a_ref, w1b_ref, t1_ref,    # BN-folded first layer (split), t1 f32
                 w2_ref, t2_ref,              # BN-folded second layer, padded to 128
                 w3_ref, b3_ref,              # last layer, padded to [128, 128]
                 out_ref):                    # [B, 128]  f32
    # Split first matmul replaces the concat: [pooled | emb] @ W1 == pooled@W1a + emb@W1b.
    h1 = jnp.dot(pooled_ref[...], w1a_ref[...], preferred_element_type=jnp.float32)
    h1 = h1 + jnp.dot(emb_ref[...], w1b_ref[...], preferred_element_type=jnp.float32)
    h1 = jnp.maximum(h1 + t1_ref[...], 0.0)          # BN folded; Dropout(0.3) = id (eval)

    h2 = jnp.dot(h1.astype(jnp.bfloat16), w2_ref[...],
                 preferred_element_type=jnp.float32)
    h2 = jnp.maximum(h2 + t2_ref[...], 0.0)          # BN folded; padded cols stay 0

    out_ref[...] = (jnp.dot(h2.astype(jnp.bfloat16), w3_ref[...],
                            preferred_element_type=jnp.float32)
                    + b3_ref[...])                    # [B, 128], cols 3..127 = pad


def news_stock_forward(hidden_state, publish, params):
    """Mirrors News_Stock.forward with BERT replaced by its last_hidden_state.

    hidden_state : [B, S, 768] float32
    publish      : [B] int32
    returns      : [B, 3] float32 logits
    """
    B = hidden_state.shape[0]

    # CLS pooling + embedding gather in the wrapper (tiny, fused by XLA); bf16 for the MXU.
    pooled = hidden_state[:, 0, :].astype(jnp.bfloat16)                    # [B, 768]
    emb = jnp.take(params["emb"], publish, axis=0).astype(jnp.bfloat16)    # [B, 256]

    args = (pooled, emb,
            params["w1a"], params["w1b"], params["t1"],
            params["w2"], params["t2"],
            params["w3"], params["b3"])

    def full_spec(a):
        nd = a.ndim
        return pl.BlockSpec(a.shape, lambda i, _nd=nd: (0,) * _nd)

    in_specs = [full_spec(a) for a in args]
    out_specs = pl.BlockSpec((B, OUT_PAD), lambda i: (0, 0))

    flops = 2 * B * (HIDDEN_BERT * H1 + EMB_DIM * H1 + H1 * H2P + H2P * OUT_PAD)
    bytes_accessed = (
        2 * (B * HIDDEN_BERT + B * EMB_DIM)                                  # bf16 acts in
        + 2 * (HIDDEN_BERT * H1 + EMB_DIM * H1 + H1 * H2P + H2P * OUT_PAD)   # bf16 weights
        + 4 * (H1 + H2P + OUT_PAD)                                           # f32 shifts
        + 4 * B * OUT_PAD)                                                   # f32 out
    cost = pl.CostEstimate(flops=flops, transcendentals=0,
                           bytes_accessed=bytes_accessed)

    out = pl.pallas_call(
        fused_kernel,
        out_shape=jax.ShapeDtypeStruct((B, OUT_PAD), jnp.float32),
        grid=(1,),
        in_specs=in_specs,
        out_specs=out_specs,
        compiler_params=pltpu.CompilerParams(
            dimension_semantics=("arbitrary",)),
        cost_estimate=cost,
    )(*args)

    return out[:, :OUT]      # drop the lane padding


def init_params(key):
    """Synthetic parameters matching the PyTorch module; returns (kernel_params, raw)."""
    ke, k1, k2, k3, kb1, kb2 = jax.random.split(key, 6)

    def linear(k, fan_in, fan_out):
        bound = 1.0 / float(fan_in) ** 0.5
        kw, kb = jax.random.split(k)
        w = jax.random.uniform(kw, (fan_in, fan_out), jnp.float32, -bound, bound)
        b = jax.random.uniform(kb, (1, fan_out), jnp.float32, -bound, bound)
        return w, b

    def bn_affine(k, n):
        kg, kb, km, kv = jax.random.split(k, 4)
        gamma = 1.0 + 0.1 * jax.random.normal(kg, (1, n), jnp.float32)
        beta = 0.1 * jax.random.normal(kb, (1, n), jnp.float32)
        mean = 0.1 * jax.random.normal(km, (1, n), jnp.float32)
        var = jnp.abs(jax.random.normal(kv, (1, n), jnp.float32)) + 0.5
        s = gamma * jax.lax.rsqrt(var + BN_EPS)
        t = beta - mean * s
        return s, t

    w1, b1 = linear(k1, HIDDEN_BERT + EMB_DIM, H1)
    w2, b2 = linear(k2, H1, H2)
    w3, b3 = linear(k3, H2, OUT)
    s1, t1 = bn_affine(kb1, H1)
    s2, t2 = bn_affine(kb2, H2)
    emb = 0.02 * jax.random.normal(ke, (VOCAB, EMB_DIM), jnp.float32)

    raw = dict(emb=emb, w1=w1, b1=b1, s1=s1, t1=t1,
               w2=w2, b2=b2, s2=s2, t2=t2, w3=w3, b3=b3)

    # Fold eval-mode BatchNorm into the weights / shifts.
    w1f = w1 * s1                      # column-wise scale
    t1f = b1 * s1 + t1
    w2f = w2 * s2
    t2f = b2 * s2 + t2

    # Pad H2 64 -> 128 and OUT 3 -> 128 for full lane-width MXU tiles / unmasked stores.
    w2p = jnp.zeros((H1, H2P), jnp.float32).at[:, :H2].set(w2f)
    t2p = jnp.zeros((1, H2P), jnp.float32).at[:, :H2].set(t2f)
    w3p = jnp.zeros((H2P, OUT_PAD), jnp.float32).at[:H2, :OUT].set(w3)
    b3p = jnp.zeros((1, OUT_PAD), jnp.float32).at[:, :OUT].set(b3)

    kernel_params = dict(
        emb=emb,                                    # gathered in the wrapper
        w1a=w1f[:HIDDEN_BERT].astype(jnp.bfloat16),
        w1b=w1f[HIDDEN_BERT:].astype(jnp.bfloat16),
        t1=t1f,                                     # f32 shift
        w2=w2p.astype(jnp.bfloat16),
        t2=t2p,                                     # f32 shift (padded cols = 0)
        w3=w3p.astype(jnp.bfloat16),
        b3=b3p,                                     # f32 bias (padded cols = 0)
    )
    return kernel_params, raw


if __name__ == "__main__":
    key = jax.random.PRNGKey(0)
    kp, kh, kpub = jax.random.split(key, 3)

    params, raw = init_params(kp)

    B, S = 8, 16   # small batch / sequence; BERT hidden size fixed at 768
    hidden_state = jax.random.normal(kh, (B, S, HIDDEN_BERT), jnp.float32)
    publish = jax.random.randint(kpub, (B,), 0, VOCAB, dtype=jnp.int32)

    logits = news_stock_forward(hidden_state, publish, params)
    logits = jax.block_until_ready(logits)

    assert logits.shape == (B, OUT), logits.shape
    assert bool(jnp.all(jnp.isfinite(logits)))

    # Reference 1: same bf16/folded/padded parameters in pure JAX (tight check of the
    # kernel math itself).
    pooled_bf = hidden_state[:, 0].astype(jnp.bfloat16)
    emb_bf = jnp.take(params["emb"], publish, axis=0).astype(jnp.bfloat16)
    q1 = jnp.maximum(
        jnp.dot(pooled_bf, params["w1a"], preferred_element_type=jnp.float32)
        + jnp.dot(emb_bf, params["w1b"], preferred_element_type=jnp.float32)
        + params["t1"], 0.0)
    q2 = jnp.maximum(
        jnp.dot(q1.astype(jnp.bfloat16), params["w2"],
                preferred_element_type=jnp.float32) + params["t2"], 0.0)
    ref_bf = (jnp.dot(q2.astype(jnp.bfloat16), params["w3"],
                      preferred_element_type=jnp.float32) + params["b3"])[:, :OUT]
    assert bool(jnp.allclose(logits, ref_bf, atol=2e-3, rtol=2e-3)), (
        float(jnp.max(jnp.abs(logits - ref_bf))))

    # Reference 2: original f32 (unfolded) classifier — loose tolerance for bf16 weights.
    pooled = hidden_state[:, 0]
    kb = jnp.take(raw["emb"], publish, axis=0)
    x = jnp.concatenate([pooled, kb], axis=1)
    r1 = jnp.maximum((x @ raw["w1"] + raw["b1"]) * raw["s1"] + raw["t1"], 0.0)
    r2 = jnp.maximum((r1 @ raw["w2"] + raw["b2"]) * raw["s2"] + raw["t2"], 0.0)
    ref = r2 @ raw["w3"] + raw["b3"]
    assert bool(jnp.allclose(logits, ref, atol=3e-2, rtol=3e-2)), (
        float(jnp.max(jnp.abs(logits - ref))))

    print("KERNEL_OK")
</pallas_src>

<mosaic_0001>
module attributes {stable_mosaic.version = 11 : i64} {
  func.func @fused_kernel(%arg0: i32, %arg1: memref<8x768xbf16, #tpu.memory_space<vmem>>, %arg2: memref<8x256xbf16, #tpu.memory_space<vmem>>, %arg3: memref<768x256xbf16, #tpu.memory_space<vmem>>, %arg4: memref<256x256xbf16, #tpu.memory_space<vmem>>, %arg5: memref<1x256xf32, #tpu.memory_space<vmem>>, %arg6: memref<256x128xbf16, #tpu.memory_space<vmem>>, %arg7: memref<1x128xf32, #tpu.memory_space<vmem>>, %arg8: memref<128x128xbf16, #tpu.memory_space<vmem>>, %arg9: memref<1x128xf32, #tpu.memory_space<vmem>>, %arg10: memref<8x128xf32, #tpu.memory_space<vmem>>) attributes {dimension_semantics = [#tpu.dimension_semantics<arbitrary>], iteration_bounds = array<i64: 1>, scalar_prefetch = 0 : i64, scratch_operands = 0 : i64, tpu.core_type = #tpu.core_type<tc>, window_params = [{pipeline_mode = #tpu.pipeline_mode<synchronous>, transform_indices = @transform_0, window_bounds = array<i64: 8, 768>}, {pipeline_mode = #tpu.pipeline_mode<synchronous>, transform_indices = @transform_1, window_bounds = array<i64: 8, 256>}, {pipeline_mode = #tpu.pipeline_mode<synchronous>, transform_indices = @transform_2, window_bounds = array<i64: 768, 256>}, {pipeline_mode = #tpu.pipeline_mode<synchronous>, transform_indices = @transform_3, window_bounds = array<i64: 256, 256>}, {pipeline_mode = #tpu.pipeline_mode<synchronous>, transform_indices = @transform_4, window_bounds = array<i64: 1, 256>}, {pipeline_mode = #tpu.pipeline_mode<synchronous>, transform_indices = @transform_5, window_bounds = array<i64: 256, 128>}, {pipeline_mode = #tpu.pipeline_mode<synchronous>, transform_indices = @transform_6, window_bounds = array<i64: 1, 128>}, {pipeline_mode = #tpu.pipeline_mode<synchronous>, transform_indices = @transform_7, window_bounds = array<i64: 128, 128>}, {pipeline_mode = #tpu.pipeline_mode<synchronous>, transform_indices = @transform_8, window_bounds = array<i64: 1, 128>}, {pipeline_mode = #tpu.pipeline_mode<synchronous>, transform_indices = @transform_9, window_bounds = array<i64: 8, 128>}]} {
    %c0 = arith.constant 0 : index
    %c0_0 = arith.constant 0 : index
    %0 = vector.load %arg1[%c0, %c0_0] : memref<8x768xbf16, #tpu.memory_space<vmem>>, vector<8x768xbf16>
    %c0_1 = arith.constant 0 : index
    %c0_2 = arith.constant 0 : index
    %1 = vector.load %arg3[%c0_1, %c0_2] : memref<768x256xbf16, #tpu.memory_space<vmem>>, vector<768x256xbf16>
    %cst = arith.constant dense<0.000000e+00> : vector<8x256xf32>
    %2 = tpu.matmul %0, %1, %cst {dimension_numbers = #tpu.dot_dimension_numbers<[1], [0], [0], [1], [0, 0, 1, 1], [], []>} : vector<8x768xbf16>, vector<768x256xbf16>, vector<8x256xf32> -> vector<8x256xf32>
    %c0_3 = arith.constant 0 : index
    %c0_4 = arith.constant 0 : index
    %3 = vector.load %arg2[%c0_3, %c0_4] : memref<8x256xbf16, #tpu.memory_space<vmem>>, vector<8x256xbf16>
    %c0_5 = arith.constant 0 : index
    %c0_6 = arith.constant 0 : index
    %4 = vector.load %arg4[%c0_5, %c0_6] : memref<256x256xbf16, #tpu.memory_space<vmem>>, vector<256x256xbf16>
    %cst_7 = arith.constant dense<0.000000e+00> : vector<8x256xf32>
    %5 = tpu.matmul %3, %4, %cst_7 {dimension_numbers = #tpu.dot_dimension_numbers<[1], [0], [0], [1], [0, 0, 1, 1], [], []>} : vector<8x256xbf16>, vector<256x256xbf16>, vector<8x256xf32> -> vector<8x256xf32>
    %6 = arith.addf %2, %5 : vector<8x256xf32>
    %c0_8 = arith.constant 0 : index
    %c0_9 = arith.constant 0 : index
    %7 = vector.load %arg5[%c0_8, %c0_9] : memref<1x256xf32, #tpu.memory_space<vmem>>, vector<1x256xf32>
    %8 = vector.broadcast %7 : vector<1x256xf32> to vector<8x256xf32>
    %9 = arith.addf %6, %8 : vector<8x256xf32>
    %cst_10 = arith.constant 0.000000e+00 : f32
    %10 = vector.broadcast %cst_10 : f32 to vector<8x256xf32>
    %11 = arith.maximumf %9, %10 : vector<8x256xf32>
    %12 = arith.truncf %11 : vector<8x256xf32> to vector<8x256xbf16>
    %c0_11 = arith.constant 0 : index
    %c0_12 = arith.constant 0 : index
    %13 = vector.load %arg6[%c0_11, %c0_12] : memref<256x128xbf16, #tpu.memory_space<vmem>>, vector<256x128xbf16>
    %cst_13 = arith.constant dense<0.000000e+00> : vector<8x128xf32>
    %14 = tpu.matmul %12, %13, %cst_13 {dimension_numbers = #tpu.dot_dimension_numbers<[1], [0], [0], [1], [0, 0, 1, 1], [], []>} : vector<8x256xbf16>, vector<256x128xbf16>, vector<8x128xf32> -> vector<8x128xf32>
    %c0_14 = arith.constant 0 : index
    %c0_15 = arith.constant 0 : index
    %15 = vector.load %arg7[%c0_14, %c0_15] : memref<1x128xf32, #tpu.memory_space<vmem>>, vector<1x128xf32>
    %16 = vector.broadcast %15 : vector<1x128xf32> to vector<8x128xf32>
    %17 = arith.addf %14, %16 : vector<8x128xf32>
    %cst_16 = arith.constant 0.000000e+00 : f32
    %18 = vector.broadcast %cst_16 : f32 to vector<8x128xf32>
    %19 = arith.maximumf %17, %18 : vector<8x128xf32>
    %20 = arith.truncf %19 : vector<8x128xf32> to vector<8x128xbf16>
    %c0_17 = arith.constant 0 : index
    %c0_18 = arith.constant 0 : index
    %21 = vector.load %arg8[%c0_17, %c0_18] : memref<128x128xbf16, #tpu.memory_space<vmem>>, vector<128x128xbf16>
    %cst_19 = arith.constant dense<0.000000e+00> : vector<8x128xf32>
    %22 = tpu.matmul %20, %21, %cst_19 {dimension_numbers = #tpu.dot_dimension_numbers<[1], [0], [0], [1], [0, 0, 1, 1], [], []>} : vector<8x128xbf16>, vector<128x128xbf16>, vector<8x128xf32> -> vector<8x128xf32>
    %c0_20 = arith.constant 0 : index
    %c0_21 = arith.constant 0 : index
    %23 = vector.load %arg9[%c0_20, %c0_21] : memref<1x128xf32, #tpu.memory_space<vmem>>, vector<1x128xf32>
    %24 = vector.broadcast %23 : vector<1x128xf32> to vector<8x128xf32>
    %25 = arith.addf %22, %24 : vector<8x128xf32>
    %c0_22 = arith.constant 0 : index
    %c0_23 = arith.constant 0 : index
    %26 = vector.load %arg10[%c0_22, %c0_23] : memref<8x128xf32, #tpu.memory_space<vmem>>, vector<8x128xf32>
    tpu.vector_store %arg10[%c0_22, %c0_23], %25 {strides = array<i32>} : memref<8x128xf32, #tpu.memory_space<vmem>>, vector<8x128xf32>,
    return
  }
  func.func @transform_0(%arg0: i32) -> (i32, i32) {
    %c0_i32 = arith.constant 0 : i32
    %c0_i32_0 = arith.constant 0 : i32
    %c0_i32_1 = arith.constant 0 : i32
    return %c0_i32, %c0_i32_0 : i32, i32
  }
  func.func @transform_1(%arg0: i32) -> (i32, i32) {
    %c0_i32 = arith.constant 0 : i32
    %c0_i32_0 = arith.constant 0 : i32
    %c0_i32_1 = arith.constant 0 : i32
    return %c0_i32, %c0_i32_0 : i32, i32
  }
  func.func @transform_2(%arg0: i32) -> (i32, i32) {
    %c0_i32 = arith.constant 0 : i32
    %c0_i32_0 = arith.constant 0 : i32
    %c0_i32_1 = arith.constant 0 : i32
    return %c0_i32, %c0_i32_0 : i32, i32
  }
  func.func @transform_3(%arg0: i32) -> (i32, i32) {
    %c0_i32 = arith.constant 0 : i32
    %c0_i32_0 = arith.constant 0 : i32
    %c0_i32_1 = arith.constant 0 : i32
    return %c0_i32, %c0_i32_0 : i32, i32
  }
  func.func @transform_4(%arg0: i32) -> (i32, i32) {
    %c0_i32 = arith.constant 0 : i32
    %c0_i32_0 = arith.constant 0 : i32
    %c0_i32_1 = arith.constant 0 : i32
    return %c0_i32, %c0_i32_0 : i32, i32
  }
  func.func @transform_5(%arg0: i32) -> (i32, i32) {
    %c0_i32 = arith.constant 0 : i32
    %c0_i32_0 = arith.constant 0 : i32
    %c0_i32_1 = arith.constant 0 : i32
    return %c0_i32, %c0_i32_0 : i32, i32
  }
  func.func @transform_6(%arg0: i32) -> (i32, i32) {
    %c0_i32 = arith.constant 0 : i32
    %c0_i32_0 = arith.constant 0 : i32
    %c0_i32_1 = arith.constant 0 : i32
    return %c0_i32, %c0_i32_0 : i32, i32
  }
  func.func @transform_7(%arg0: i32) -> (i32, i32) {
    %c0_i32 = arith.constant 0 : i32
    %c0_i32_0 = arith.constant 0 : i32
    %c0_i32_1 = arith.constant 0 : i32
    return %c0_i32, %c0_i32_0 : i32, i32
  }
  func.func @transform_8(%arg0: i32) -> (i32, i32) {
    %c0_i32 = arith.constant 0 : i32
    %c0_i32_0 = arith.constant 0 : i32
    %c0_i32_1 = arith.constant 0 : i32
    return %c0_i32, %c0_i32_0 : i32, i32
  }
  func.func @transform_9(%arg0: i32) -> (i32, i32) {
    %c0_i32 = arith.constant 0 : i32
    %c0_i32_0 = arith.constant 0 : i32
    %c0_i32_1 = arith.constant 0 : i32
    return %c0_i32, %c0_i32_0 : i32, i32
  }
}

</mosaic_0001>

<llo_original>
// kernel: tpu_custom_call.1
$region0: #{tpu_custom_call.1}
  #allocation0 [shape = 'u32[]', space=smem, size = 0x4, offset = 0x4, fixed_abs, tag = 'smem constant byte address 0x4 - core index']
  #allocation1 [shape = 'u32[72,128]{1,0:T(1,128)}', space=vmem, size = 0x9000, scoped, tag = 'internal scratch']
  %s0 = inlined_call_operand.hbm [shape: bf16[8,768], index: 0, kind: input, shape index: {}]
  %s1 = inlined_call_operand.hbm [shape: bf16[8,256], index: 1, kind: input, shape index: {}]
  %s2 = inlined_call_operand.hbm [shape: bf16[768,256], index: 2, kind: input, shape index: {}]
  %s3 = inlined_call_operand.hbm [shape: bf16[256,256], index: 3, kind: input, shape index: {}]
  %s4 = inlined_call_operand.vmem [shape: f32[1,256], index: 4, kind: input, shape index: {}]
  %s5 = inlined_call_operand.hbm [shape: bf16[256,128], index: 5, kind: input, shape index: {}]
  %s6 = inlined_call_operand.vmem [shape: f32[1,128], index: 6, kind: input, shape index: {}]
  %s7 = inlined_call_operand.hbm [shape: bf16[128,128], index: 7, kind: input, shape index: {}]
  %s8 = inlined_call_operand.vmem [shape: f32[1,128], index: 8, kind: input, shape index: {}]
  %s9 = inlined_call_operand.hbm [shape: f32[8,128], index: 9, kind: output, shape index: {}]
  %s10 = sld [smem:[#allocation0]]
  $region70: #{tpu_custom_call.1} parent=0
    _
  %s12 = ssub.s32 1, %s10
  %s13 = scalar_select 0, %s12, %s10
  $region1: #{tpu_custom_call.1} parent=0
    #allocation2 [shape = 'u8[12288]{0}', space=vmem, size = 0x3000, scoped, tag = 'input window, operand 0, single buffered']
    #allocation3 [shape = 's32[1]{0}', space=sflag, size = 0x4, scoped, tag = 'scoped memory for tpu_custom_call.1']
    #allocation4 [shape = 's32[1]{0}', space=sflag, size = 0x4, scoped, tag = 'scoped memory for tpu_custom_call.1']
    #allocation5 [shape = 'u8[4096]{0}', space=vmem, size = 0x1000, scoped, tag = 'input window, operand 1, single buffered']
    #allocation6 [shape = 's32[1]{0}', space=sflag, size = 0x4, scoped, tag = 'scoped memory for tpu_custom_call.1']
    #allocation7 [shape = 'u8[393216]{0}', space=vmem, size = 0x60000, scoped, tag = 'input window, operand 2, single buffered']
    #allocation8 [shape = 'u8[131072]{0}', space=vmem, size = 0x20000, scoped, tag = 'input window, operand 3, single buffered']
    #allocation9 [shape = 's32[1]{0}', space=sflag, size = 0x4, scoped, tag = 'scoped memory for tpu_custom_call.1']
    #allocation10 [shape = 'u8[65536]{0}', space=vmem, size = 0x10000, scoped, tag = 'input window, operand 5, single buffered']
    #allocation11 [shape = 'u8[32768]{0}', space=vmem, size = 0x8000, scoped, tag = 'input window, operand 7, single buffered']
    #allocation12 [shape = 's32[1]{0}', space=sflag, size = 0x4, scoped, tag = 'scoped memory for tpu_custom_call.1']
    #allocation13 [shape = 'u8[4096]{0}', space=vmem, size = 0x1000, scoped, tag = 'output window, operand 0, single buffered']
    %14 = vsyncpa [#allocation3], 0
    %15 = vsyncpa [#allocation6], 0
    %16 = vsyncpa [#allocation9], 0
    %17 = vsyncpa [#allocation12], 0
    %18 = vsyncpa [#allocation4], 0
    // Predicated region
    $region2: #{tpu_custom_call.1} parent=1 // pred_check
      _
    $region3: #{tpu_custom_call.1} parent=1 // pred_check_branch
      %20 = sbr.rel (0) target = $region5
    $region4: #{tpu_custom_call.1} parent=1 // pred_region
      %22 = vsyncadd [#allocation3], 0
      %s24 = sshll.u32 %s0, 4
      %s25 = int_to_ptr.hbm [resolvable:$true] %s24
      %s26 = sshll.u32 [#allocation2], 4
      %s27 = int_to_ptr.vmem [resolvable:$true] %s26
      %29 = dma.hbm_to_vmem [thread:$0]  %s25, 384, %s27, [#allocation3]
    $region5: #{tpu_custom_call.1} parent=1 // pred_fallthru
      _
    // Predicated region
    $region6: #{tpu_custom_call.1} parent=1 // pred_check
      _
    $region7: #{tpu_custom_call.1} parent=1 // pred_check_branch
      %31 = sbr.rel (0) target = $region9
    $region8: #{tpu_custom_call.1} parent=1 // pred_region
      %33 = vsyncadd [#allocation6], 0
      %s35 = sshll.u32 %s1, 4
      %s36 = int_to_ptr.hbm [resolvable:$true] %s35
      %s37 = sshll.u32 [#allocation5], 4
      %s38 = int_to_ptr.vmem [resolvable:$true] %s37
      %40 = dma.hbm_to_vmem [thread:$0]  %s36, 128, %s38, [#allocation6]
    $region9: #{tpu_custom_call.1} parent=1 // pred_fallthru
      _
    // Predicated region
    $region10: #{tpu_custom_call.1} parent=1 // pred_check
      _
    $region11: #{tpu_custom_call.1} parent=1 // pred_check_branch
      %42 = sbr.rel (0) target = $region13
    $region12: #{tpu_custom_call.1} parent=1 // pred_region
      %44 = vsyncadd [#allocation6], 0
      %s45 = sshll.u32 %s2, 4
      %s46 = int_to_ptr.hbm [resolvable:$true] %s45
      %s47 = sshll.u32 [#allocation7], 4
      %s48 = int_to_ptr.vmem [resolvable:$true] %s47
      %53 = dma.hbm_to_vmem [thread:$0]  %s46, 12288, %s48, [#allocation6], 128, 128, 8
    $region13: #{tpu_custom_call.1} parent=1 // pred_fallthru
      _
    // Predicated region
    $region14: #{tpu_custom_call.1} parent=1 // pred_check
      _
    $region15: #{tpu_custom_call.1} parent=1 // pred_check_branch
      %55 = sbr.rel (0) target = $region17
    $region16: #{tpu_custom_call.1} parent=1 // pred_region
      %57 = vsyncadd [#allocation9], 0
      %s58 = sshll.u32 %s3, 4
      %s59 = int_to_ptr.hbm [resolvable:$true] %s58
      %s60 = sshll.u32 [#allocation8], 4
      %s61 = int_to_ptr.vmem [resolvable:$true] %s60
      %66 = dma.hbm_to_vmem [thread:$0]  %s59, 4096, %s61, [#allocation9], 128, 128, 8
    $region17: #{tpu_custom_call.1} parent=1 // pred_fallthru
      _
    // Predicated region
    $region18: #{tpu_custom_call.1} parent=1 // pred_check
      _
    $region19: #{tpu_custom_call.1} parent=1 // pred_check_branch
      %68 = sbr.rel (0) target = $region21
    $region20: #{tpu_custom_call.1} parent=1 // pred_region
      _
    $region21: #{tpu_custom_call.1} parent=1 // pred_fallthru
      _
    // Predicated region
    $region22: #{tpu_custom_call.1} parent=1 // pred_check
      _
    $region23: #{tpu_custom_call.1} parent=1 // pred_check_branch
      %70 = sbr.rel (0) target = $region25
    $region24: #{tpu_custom_call.1} parent=1 // pred_region
      %72 = vsyncadd [#allocation9], 0
      %s73 = sshll.u32 %s5, 4
      %s74 = int_to_ptr.hbm [resolvable:$true] %s73
      %s75 = sshll.u32 [#allocation10], 4
      %s76 = int_to_ptr.vmem [resolvable:$true] %s75
      %81 = dma.hbm_to_vmem [thread:$0]  %s74, 2048, %s76, [#allocation9], 64, 64, 4
    $region25: #{tpu_custom_call.1} parent=1 // pred_fallthru
      _
    // Predicated region
    $region26: #{tpu_custom_call.1} parent=1 // pred_check
      _
    $region27: #{tpu_custom_call.1} parent=1 // pred_check_branch
      %83 = sbr.rel (0) target = $region29
    $region28: #{tpu_custom_call.1} parent=1 // pred_region
      _
    $region29: #{tpu_custom_call.1} parent=1 // pred_fallthru
      _
    // Predicated region
    $region30: #{tpu_custom_call.1} parent=1 // pred_check
      _
    $region31: #{tpu_custom_call.1} parent=1 // pred_check_branch
      %85 = sbr.rel (0) target = $region33
    $region32: #{tpu_custom_call.1} parent=1 // pred_region
      %87 = vsyncadd [#allocation12], 0
      %s88 = sshll.u32 %s7, 4
      %s89 = int_to_ptr.hbm [resolvable:$true] %s88
      %s90 = sshll.u32 [#allocation11], 4
      %s91 = int_to_ptr.vmem [resolvable:$true] %s90
      %96 = dma.hbm_to_vmem [thread:$0]  %s89, 1024, %s91, [#allocation12], 64, 64, 4
    $region33: #{tpu_custom_call.1} parent=1 // pred_fallthru
      _
    // Predicated region
    $region34: #{tpu_custom_call.1} parent=1 // pred_check
      _
    $region35: #{tpu_custom_call.1} parent=1 // pred_check_branch
      %98 = sbr.rel (0) target = $region37
    $region36: #{tpu_custom_call.1} parent=1 // pred_region
      _
    $region37: #{tpu_custom_call.1} parent=1 // pred_fallthru
      _
    // Predicated region
    $region38: #{tpu_custom_call.1} parent=1 // pred_check
      _
    $region39: #{tpu_custom_call.1} parent=1 // pred_check_branch
      %100 = sbr.rel (0) target = $region41
    $region40: #{tpu_custom_call.1} parent=1 // pred_region
      %102 = dma.done [#allocation3], 384
    $region41: #{tpu_custom_call.1} parent=1 // pred_fallthru
      _
    // Predicated region
    $region42: #{tpu_custom_call.1} parent=1 // pred_check
      _
    $region43: #{tpu_custom_call.1} parent=1 // pred_check_branch
      %104 = sbr.rel (0) target = $region45
    $region44: #{tpu_custom_call.1} parent=1 // pred_region
      %106 = dma.done [#allocation6], 128
    $region45: #{tpu_custom_call.1} parent=1 // pred_fallthru
      _
    // Predicated region
    $region46: #{tpu_custom_call.1} parent=1 // pred_check
      _
    $region47: #{tpu_custom_call.1} parent=1 // pred_check_branch
      %108 = sbr.rel (0) target = $region49
    $region48: #{tpu_custom_call.1} parent=1 // pred_region
      %110 = dma.done [#allocation6], 12288
    $region49: #{tpu_custom_call.1} parent=1 // pred_fallthru
      _
    // Predicated region
    $region50: #{tpu_custom_call.1} parent=1 // pred_check
      _
    $region51: #{tpu_custom_call.1} parent=1 // pred_check_branch
      %112 = sbr.rel (0) target = $region53
    $region52: #{tpu_custom_call.1} parent=1 // pred_region
      %114 = dma.done [#allocation9], 4096
    $region53: #{tpu_custom_call.1} parent=1 // pred_fallthru
      _
    // Predicated region
    $region54: #{tpu_custom_call.1} parent=1 // pred_check
      _
    $region55: #{tpu_custom_call.1} parent=1 // pred_check_branch
      %116 = sbr.rel (0) target = $region57
    $region56: #{tpu_custom_call.1} parent=1 // pred_region
      %118 = dma.done [#allocation9], 2048
    $region57: #{tpu_custom_call.1} parent=1 // pred_fallthru
      _
    // Predicated region
    $region58: #{tpu_custom_call.1} parent=1 // pred_check
      _
    $region59: #{tpu_custom_call.1} parent=1 // pred_check_branch
      %120 = sbr.rel (0) target = $region61
    $region60: #{tpu_custom_call.1} parent=1 // pred_region
      %122 = dma.done [#allocation12], 1024
    $region61: #{tpu_custom_call.1} parent=1 // pred_fallthru
      _
    %v123 = vld [vmem:[#allocation2] sm:$0xff]
    %v124 = vld [vmem:[#allocation2 + $0x8] sm:$0xff]
    %v125 = vld [vmem:[#allocation2 + $0x10] sm:$0xff]
    %v126 = vld [vmem:[#allocation7] sm:$0xff]
    %v127 = vld [vmem:[#allocation7 + $0x8] sm:$0xff]
    %v128 = vld [vmem:[#allocation7 + $0x10] sm:$0xff]
    %v129 = vld [vmem:[#allocation7 + $0x18] sm:$0xff]
    %v130 = vld [vmem:[#allocation7 + $0x20] sm:$0xff]
    %v131 = vld [vmem:[#allocation7 + $0x28] sm:$0xff]
    %v132 = vld [vmem:[#allocation7 + $0x30] sm:$0xff]
    %v133 = vld [vmem:[#allocation7 + $0x38] sm:$0xff]
    %v134 = vld [vmem:[#allocation7 + $0x40] sm:$0xff]
    %v135 = vld [vmem:[#allocation7 + $0x48] sm:$0xff]
    %v136 = vld [vmem:[#allocation7 + $0x50] sm:$0xff]
    %v137 = vld [vmem:[#allocation7 + $0x58] sm:$0xff]
    %v138 = vld [vmem:[#allocation7 + $0x60] sm:$0xff]
    %v139 = vld [vmem:[#allocation7 + $0x68] sm:$0xff]
    %v140 = vld [vmem:[#allocation7 + $0x70] sm:$0xff]
    %v141 = vld [vmem:[#allocation7 + $0x78] sm:$0xff]
    %v142 = vld [vmem:[#allocation7 + $0x80] sm:$0xff]
    %v143 = vld [vmem:[#allocation7 + $0x88] sm:$0xff]
    %v144 = vld [vmem:[#allocation7 + $0x90] sm:$0xff]
    %v145 = vld [vmem:[#allocation7 + $0x98] sm:$0xff]
    %v146 = vld [vmem:[#allocation7 + $0xa0] sm:$0xff]
    %v147 = vld [vmem:[#allocation7 + $0xa8] sm:$0xff]
    %v148 = vld [vmem:[#allocation7 + $0xb0] sm:$0xff]
    %v149 = vld [vmem:[#allocation7 + $0xb8] sm:$0xff]
    %v150 = vld [vmem:[#allocation7 + $0xc0] sm:$0xff]
    %v151 = vld [vmem:[#allocation7 + $0xc8] sm:$0xff]
    %v152 = vld [vmem:[#allocation7 + $0xd0] sm:$0xff]
    %v153 = vld [vmem:[#allocation7 + $0xd8] sm:$0xff]
    %v154 = vld [vmem:[#allocation7 + $0xe0] sm:$0xff]
    %v155 = vld [vmem:[#allocation7 + $0xe8] sm:$0xff]
    %v156 = vld [vmem:[#allocation7 + $0xf0] sm:$0xff]
    %v157 = vld [vmem:[#allocation7 + $0xf8] sm:$0xff]
    %v158 = vld [vmem:[#allocation7 + $0x100] sm:$0xff]
    %v159 = vld [vmem:[#allocation7 + $0x108] sm:$0xff]
    %v160 = vld [vmem:[#allocation7 + $0x110] sm:$0xff]
    %v161 = vld [vmem:[#allocation7 + $0x118] sm:$0xff]
    %v162 = vld [vmem:[#allocation7 + $0x120] sm:$0xff]
    %v163 = vld [vmem:[#allocation7 + $0x128] sm:$0xff]
    %v164 = vld [vmem:[#allocation7 + $0x130] sm:$0xff]
    %v165 = vld [vmem:[#allocation7 + $0x138] sm:$0xff]
    %v166 = vld [vmem:[#allocation7 + $0x140] sm:$0xff]
    %v167 = vld [vmem:[#allocation7 + $0x148] sm:$0xff]
    %v168 = vld [vmem:[#allocation7 + $0x150] sm:$0xff]
    %v169 = vld [vmem:[#allocation7 + $0x158] sm:$0xff]
    %v170 = vld [vmem:[#allocation7 + $0x160] sm:$0xff]
    %v171 = vld [vmem:[#allocation7 + $0x168] sm:$0xff]
    %v172 = vld [vmem:[#allocation7 + $0x170] sm:$0xff]
    %v173 = vld [vmem:[#allocation7 + $0x178] sm:$0xff]
    %v174 = vld [vmem:[#allocation7 + $0x180] sm:$0xff]
    %v175 = vld [vmem:[#allocation7 + $0x188] sm:$0xff]
    %v176 = vld [vmem:[#allocation7 + $0x190] sm:$0xff]
    %v177 = vld [vmem:[#allocation7 + $0x198] sm:$0xff]
    %v178 = vld [vmem:[#allocation7 + $0x1a0] sm:$0xff]
    %v179 = vld [vmem:[#allocation7 + $0x1a8] sm:$0xff]
    %v180 = vld [vmem:[#allocation7 + $0x1b0] sm:$0xff]
    %v181 = vld [vmem:[#allocation7 + $0x1b8] sm:$0xff]
    %v182 = vld [vmem:[#allocation7 + $0x1c0] sm:$0xff]
    %v183 = vld [vmem:[#allocation7 + $0x1c8] sm:$0xff]
    %v184 = vld [vmem:[#allocation7 + $0x1d0] sm:$0xff]
    %v185 = vld [vmem:[#allocation7 + $0x1d8] sm:$0xff]
    %v186 = vld [vmem:[#allocation7 + $0x1e0] sm:$0xff]
    %v187 = vld [vmem:[#allocation7 + $0x1e8] sm:$0xff]
    %v188 = vld [vmem:[#allocation7 + $0x1f0] sm:$0xff]
    %v189 = vld [vmem:[#allocation7 + $0x1f8] sm:$0xff]
    %v190 = vld [vmem:[#allocation7 + $0x200] sm:$0xff]
    %v191 = vld [vmem:[#allocation7 + $0x208] sm:$0xff]
    %v192 = vld [vmem:[#allocation7 + $0x210] sm:$0xff]
    %v193 = vld [vmem:[#allocation7 + $0x218] sm:$0xff]
    %v194 = vld [vmem:[#allocation7 + $0x220] sm:$0xff]
    %v195 = vld [vmem:[#allocation7 + $0x228] sm:$0xff]
    %v196 = vld [vmem:[#allocation7 + $0x230] sm:$0xff]
    %v197 = vld [vmem:[#allocation7 + $0x238] sm:$0xff]
    %v198 = vld [vmem:[#allocation7 + $0x240] sm:$0xff]
    %v199 = vld [vmem:[#allocation7 + $0x248] sm:$0xff]
    %v200 = vld [vmem:[#allocation7 + $0x250] sm:$0xff]
    %v201 = vld [vmem:[#allocation7 + $0x258] sm:$0xff]
    %v202 = vld [vmem:[#allocation7 + $0x260] sm:$0xff]
    %v203 = vld [vmem:[#allocation7 + $0x268] sm:$0xff]
    %v204 = vld [vmem:[#allocation7 + $0x270] sm:$0xff]
    %v205 = vld [vmem:[#allocation7 + $0x278] sm:$0xff]
    %v206 = vld [vmem:[#allocation7 + $0x280] sm:$0xff]
    %v207 = vld [vmem:[#allocation7 + $0x288] sm:$0xff]
    %v208 = vld [vmem:[#allocation7 + $0x290] sm:$0xff]
    %v209 = vld [vmem:[#allocation7 + $0x298] sm:$0xff]
    %v210 = vld [vmem:[#allocation7 + $0x2a0] sm:$0xff]
    %v211 = vld [vmem:[#allocation7 + $0x2a8] sm:$0xff]
    %v212 = vld [vmem:[#allocation7 + $0x2b0] sm:$0xff]
    %v213 = vld [vmem:[#allocation7 + $0x2b8] sm:$0xff]
    %v214 = vld [vmem:[#allocation7 + $0x2c0] sm:$0xff]
    %v215 = vld [vmem:[#allocation7 + $0x2c8] sm:$0xff]
    %v216 = vld [vmem:[#allocation7 + $0x2d0] sm:$0xff]
    %v217 = vld [vmem:[#allocation7 + $0x2d8] sm:$0xff]
    %v218 = vld [vmem:[#allocation7 + $0x2e0] sm:$0xff]
    %v219 = vld [vmem:[#allocation7 + $0x2e8] sm:$0xff]
    %v220 = vld [vmem:[#allocation7 + $0x2f0] sm:$0xff]
    %v221 = vld [vmem:[#allocation7 + $0x2f8] sm:$0xff]
    %v222 = vld [vmem:[#allocation5] sm:$0xff]
    %v223 = vld [vmem:[#allocation8] sm:$0xff]
    %v224 = vld [vmem:[#allocation8 + $0x8] sm:$0xff]
    %v225 = vld [vmem:[#allocation8 + $0x10] sm:$0xff]
    %v226 = vld [vmem:[#allocation8 + $0x18] sm:$0xff]
    %v227 = vld [vmem:[#allocation8 + $0x20] sm:$0xff]
    %v228 = vld [vmem:[#allocation8 + $0x28] sm:$0xff]
    %v229 = vld [vmem:[#allocation8 + $0x30] sm:$0xff]
    %v230 = vld [vmem:[#allocation8 + $0x38] sm:$0xff]
    %v231 = vld [vmem:[#allocation8 + $0x40] sm:$0xff]
    %v232 = vld [vmem:[#allocation8 + $0x48] sm:$0xff]
    %v233 = vld [vmem:[#allocation8 + $0x50] sm:$0xff]
    %v234 = vld [vmem:[#allocation8 + $0x58] sm:$0xff]
    %v235 = vld [vmem:[#allocation8 + $0x60] sm:$0xff]
    %v236 = vld [vmem:[#allocation8 + $0x68] sm:$0xff]
    %v237 = vld [vmem:[#allocation8 + $0x70] sm:$0xff]
    %v238 = vld [vmem:[#allocation8 + $0x78] sm:$0xff]
    %v239 = vld [vmem:[#allocation8 + $0x80] sm:$0xff]
    %v240 = vld [vmem:[#allocation8 + $0x88] sm:$0xff]
    %v241 = vld [vmem:[#allocation8 + $0x90] sm:$0xff]
    %v242 = vld [vmem:[#allocation8 + $0x98] sm:$0xff]
    %v243 = vld [vmem:[#allocation8 + $0xa0] sm:$0xff]
    %v244 = vld [vmem:[#allocation8 + $0xa8] sm:$0xff]
    %v245 = vld [vmem:[#allocation8 + $0xb0] sm:$0xff]
    %v246 = vld [vmem:[#allocation8 + $0xb8] sm:$0xff]
    %v247 = vld [vmem:[#allocation8 + $0xc0] sm:$0xff]
    %v248 = vld [vmem:[#allocation8 + $0xc8] sm:$0xff]
    %v249 = vld [vmem:[#allocation8 + $0xd0] sm:$0xff]
    %v250 = vld [vmem:[#allocation8 + $0xd8] sm:$0xff]
    %v251 = vld [vmem:[#allocation8 + $0xe0] sm:$0xff]
    %v252 = vld [vmem:[#allocation8 + $0xe8] sm:$0xff]
    %v253 = vld [vmem:[#allocation8 + $0xf0] sm:$0xff]
    %v254 = vld [vmem:[#allocation8 + $0xf8] sm:$0xff]
    %v256 = vunpack.c.l.b16 %v222
    %v257 = vunpack.c.h.b16 %v222
    %v258 = vpack.c.b16 %v256, %v256
    %v259 = vpack.c.b16 %v257, %v257
    %v294 = vunpack.c.l.b16 %v223
    %v295 = vunpack.c.h.b16 %v223
    %v296 = vunpack.c.l.b16 %v224
    %v297 = vunpack.c.h.b16 %v224
    %v298 = vunpack.c.l.b16 %v225
    %v299 = vunpack.c.h.b16 %v225
    %v300 = vunpack.c.l.b16 %v226
    %v301 = vunpack.c.h.b16 %v226
    %v302 = vunpack.c.l.b16 %v227
    %v303 = vunpack.c.h.b16 %v227
    %v304 = vunpack.c.l.b16 %v228
    %v305 = vunpack.c.h.b16 %v228
    %v306 = vunpack.c.l.b16 %v229
    %v307 = vunpack.c.h.b16 %v229
    %v308 = vunpack.c.l.b16 %v230
    %v309 = vunpack.c.h.b16 %v230
    %v310 = vunpack.c.l.b16 %v231
    %v311 = vunpack.c.h.b16 %v231
    %v312 = vunpack.c.l.b16 %v232
    %v313 = vunpack.c.h.b16 %v232
    %v314 = vunpack.c.l.b16 %v233
    %v315 = vunpack.c.h.b16 %v233
    %v316 = vunpack.c.l.b16 %v234
    %v317 = vunpack.c.h.b16 %v234
    %v318 = vunpack.c.l.b16 %v235
    %v319 = vunpack.c.h.b16 %v235
    %v320 = vunpack.c.l.b16 %v236
    %v321 = vunpack.c.h.b16 %v236
    %v322 = vunpack.c.l.b16 %v237
    %v323 = vunpack.c.h.b16 %v237
    %v324 = vunpack.c.l.b16 %v238
    %v325 = vunpack.c.h.b16 %v238
    %v326 = vunpack.c.l.b16 %v239
    %v327 = vunpack.c.h.b16 %v239
    %v328 = vunpack.c.l.b16 %v240
    %v329 = vunpack.c.h.b16 %v240
    %v330 = vunpack.c.l.b16 %v241
    %v331 = vunpack.c.h.b16 %v241
    %v332 = vunpack.c.l.b16 %v242
    %v333 = vunpack.c.h.b16 %v242
    %v334 = vunpack.c.l.b16 %v243
    %v335 = vunpack.c.h.b16 %v243
    %v336 = vunpack.c.l.b16 %v244
    %v337 = vunpack.c.h.b16 %v244
    %v338 = vunpack.c.l.b16 %v245
    %v339 = vunpack.c.h.b16 %v245
    %v340 = vunpack.c.l.b16 %v246
    %v341 = vunpack.c.h.b16 %v246
    %v342 = vunpack.c.l.b16 %v247
    %v343 = vunpack.c.h.b16 %v247
    %v344 = vunpack.c.l.b16 %v248
    %v345 = vunpack.c.h.b16 %v248
    %v346 = vunpack.c.l.b16 %v249
    %v347 = vunpack.c.h.b16 %v249
    %v348 = vunpack.c.l.b16 %v250
    %v349 = vunpack.c.h.b16 %v250
    %v350 = vunpack.c.l.b16 %v251
    %v351 = vunpack.c.h.b16 %v251
    %v352 = vunpack.c.l.b16 %v252
    %v353 = vunpack.c.h.b16 %v252
    %v354 = vunpack.c.l.b16 %v253
    %v355 = vunpack.c.h.b16 %v253
    %v356 = vunpack.c.l.b16 %v254
    %v357 = vunpack.c.h.b16 %v254
    %v358 = vpack.c.b16 %v296, %v294
    %v359 = vpack.c.b16 %v297, %v295
    %v360 = vpack.c.b16 %v300, %v298
    %v361 = vpack.c.b16 %v301, %v299
    %v362 = vpack.c.b16 %v304, %v302
    %v363 = vpack.c.b16 %v305, %v303
    %v364 = vpack.c.b16 %v308, %v306
    %v365 = vpack.c.b16 %v309, %v307
    %v366 = vpack.c.b16 %v312, %v310
    %v367 = vpack.c.b16 %v313, %v311
    %v368 = vpack.c.b16 %v316, %v314
    %v369 = vpack.c.b16 %v317, %v315
    %v370 = vpack.c.b16 %v320, %v318
    %v371 = vpack.c.b16 %v321, %v319
    %v372 = vpack.c.b16 %v324, %v322
    %v373 = vpack.c.b16 %v325, %v323
    %v374 = vpack.c.b16 %v328, %v326
    %v375 = vpack.c.b16 %v329, %v327
    %v376 = vpack.c.b16 %v332, %v330
    %v377 = vpack.c.b16 %v333, %v331
    %v378 = vpack.c.b16 %v336, %v334
    %v379 = vpack.c.b16 %v337, %v335
    %v380 = vpack.c.b16 %v340, %v338
    %v381 = vpack.c.b16 %v341, %v339
    %v382 = vpack.c.b16 %v344, %v342
    %v383 = vpack.c.b16 %v345, %v343
    %v384 = vpack.c.b16 %v348, %v346
    %v385 = vpack.c.b16 %v349, %v347
    %v386 = vpack.c.b16 %v352, %v350
    %v387 = vpack.c.b16 %v353, %v351
    %v388 = vpack.c.b16 %v356, %v354
    %v389 = vpack.c.b16 %v357, %v355
    %422 = vmatpush.bf16.msra.mxu0 %v372
    %423 = vmatpush.bf16.msra.mxu0 %v370
    %424 = vmatpush.bf16.msra.mxu0 %v368
    %425 = vmatpush.bf16.msra.mxu0 %v366
    %426 = vmatpush.bf16.msra.mxu0 %v364
    %427 = vmatpush.bf16.msra.mxu0 %v362
    %428 = vmatpush.bf16.msra.mxu0 %v360
    %429 = vmatpush.bf16.msra.mxu0 %v358
    %430 = vmatmul.bf16.gmra.mxu0 %v258
    %v431 = vpop.f32.mrf.mxu0
    %v432 = vadd.f32 0.0, %v431
    %v433 = vpop.f32.mrf.mxu0
    %434 = vdwg.mxu0
    %435 = vmatpush.bf16.msra.mxu0 %v388
    %436 = vmatpush.bf16.msra.mxu0 %v386
    %437 = vmatpush.bf16.msra.mxu0 %v384
    %438 = vmatpush.bf16.msra.mxu0 %v382
    %439 = vmatpush.bf16.msra.mxu0 %v380
    %440 = vmatpush.bf16.msra.mxu0 %v378
    %441 = vmatpush.bf16.msra.mxu0 %v376
    %442 = vmatpush.bf16.msra.mxu0 %v374
    %443 = vmatmul.bf16.gmra.mxu0 %v259
    %v444 = vpop.f32.mrf.mxu0
    %v445 = vadd.f32 %v432, %v444
    %v446 = vpop.f32.mrf.mxu0
    %447 = vdwg.mxu0
    %448 = vmatpush.bf16.msra.mxu0 %v373
    %449 = vmatpush.bf16.msra.mxu0 %v371
    %450 = vmatpush.bf16.msra.mxu0 %v369
    %451 = vmatpush.bf16.msra.mxu0 %v367
    %452 = vmatpush.bf16.msra.mxu0 %v365
    %453 = vmatpush.bf16.msra.mxu0 %v363
    %454 = vmatpush.bf16.msra.mxu0 %v361
    %455 = vmatpush.bf16.msra.mxu0 %v359
    %456 = vmatmul.bf16.gmra.mxu0 %v258
    %v457 = vpop.f32.mrf.mxu0
    %v458 = vadd.f32 0.0, %v457
    %v459 = vpop.f32.mrf.mxu0
    %460 = vdwg.mxu0
    %461 = vmatpush.bf16.msra.mxu0 %v389
    %462 = vmatpush.bf16.msra.mxu0 %v387
    %463 = vmatpush.bf16.msra.mxu0 %v385
    %464 = vmatpush.bf16.msra.mxu0 %v383
    %465 = vmatpush.bf16.msra.mxu0 %v381
    %466 = vmatpush.bf16.msra.mxu0 %v379
    %467 = vmatpush.bf16.msra.mxu0 %v377
    %468 = vmatpush.bf16.msra.mxu0 %v375
    %469 = vmatmul.bf16.gmra.mxu0 %v259
    %v470 = vpop.f32.mrf.mxu0
    %v471 = vadd.f32 %v458, %v470
    %v472 = vpop.f32.mrf.mxu0
    %473 = vdwg.mxu0
    %v477 = vunpack.c.l.b16 %v123
    %v478 = vunpack.c.h.b16 %v123
    %v479 = vunpack.c.l.b16 %v124
    %v480 = vunpack.c.h.b16 %v124
    %v481 = vunpack.c.l.b16 %v125
    %v482 = vunpack.c.h.b16 %v125
    %v483 = vpack.c.b16 %v477, %v477
    %v484 = vpack.c.b16 %v478, %v478
    %v485 = vpack.c.b16 %v479, %v479
    %v486 = vpack.c.b16 %v480, %v480
    %v487 = vpack.c.b16 %v481, %v481
    %v488 = vpack.c.b16 %v482, %v482
    %v591 = vunpack.c.l.b16 %v126
    %v592 = vunpack.c.h.b16 %v126
    %v593 = vunpack.c.l.b16 %v127
    %v594 = vunpack.c.h.b16 %v127
    %v595 = vunpack.c.l.b16 %v128
    %v596 = vunpack.c.h.b16 %v128
    %v597 = vunpack.c.l.b16 %v129
    %v598 = vunpack.c.h.b16 %v129
    %v599 = vunpack.c.l.b16 %v130
    %v600 = vunpack.c.h.b16 %v130
    %v601 = vunpack.c.l.b16 %v131
    %v602 = vunpack.c.h.b16 %v131
    %v603 = vunpack.c.l.b16 %v132
    %v604 = vunpack.c.h.b16 %v132
    %v605 = vunpack.c.l.b16 %v133
    %v606 = vunpack.c.h.b16 %v133
    %v607 = vunpack.c.l.b16 %v134
    %v608 = vunpack.c.h.b16 %v134
    %v609 = vunpack.c.l.b16 %v135
    %v610 = vunpack.c.h.b16 %v135
    %v611 = vunpack.c.l.b16 %v136
    %v612 = vunpack.c.h.b16 %v136
    %v613 = vunpack.c.l.b16 %v137
    %v614 = vunpack.c.h.b16 %v137
    %v615 = vunpack.c.l.b16 %v138
    %v616 = vunpack.c.h.b16 %v138
    %v617 = vunpack.c.l.b16 %v139
    %v618 = vunpack.c.h.b16 %v139
    %v619 = vunpack.c.l.b16 %v140
    %v620 = vunpack.c.h.b16 %v140
    %v621 = vunpack.c.l.b16 %v141
    %v622 = vunpack.c.h.b16 %v141
    %v623 = vunpack.c.l.b16 %v142
    %v624 = vunpack.c.h.b16 %v142
    %v625 = vunpack.c.l.b16 %v143
    %v626 = vunpack.c.h.b16 %v143
    %v627 = vunpack.c.l.b16 %v144
    %v628 = vunpack.c.h.b16 %v144
    %v629 = vunpack.c.l.b16 %v145
    %v630 = vunpack.c.h.b16 %v145
    %v631 = vunpack.c.l.b16 %v146
    %v632 = vunpack.c.h.b16 %v146
    %v633 = vunpack.c.l.b16 %v147
    %v634 = vunpack.c.h.b16 %v147
    %v635 = vunpack.c.l.b16 %v148
    %v636 = vunpack.c.h.b16 %v148
    %v637 = vunpack.c.l.b16 %v149
    %v638 = vunpack.c.h.b16 %v149
    %v639 = vunpack.c.l.b16 %v150
    %v640 = vunpack.c.h.b16 %v150
    %v641 = vunpack.c.l.b16 %v151
    %v642 = vunpack.c.h.b16 %v151
    %v643 = vunpack.c.l.b16 %v152
    %v644 = vunpack.c.h.b16 %v152
    %v645 = vunpack.c.l.b16 %v153
    %v646 = vunpack.c.h.b16 %v153
    %v647 = vunpack.c.l.b16 %v154
    %v648 = vunpack.c.h.b16 %v154
    %v649 = vunpack.c.l.b16 %v155
    %v650 = vunpack.c.h.b16 %v155
    %v651 = vunpack.c.l.b16 %v156
    %v652 = vunpack.c.h.b16 %v156
    %v653 = vunpack.c.l.b16 %v157
    %v654 = vunpack.c.h.b16 %v157
    %v655 = vunpack.c.l.b16 %v158
    %v656 = vunpack.c.h.b16 %v158
    %v657 = vunpack.c.l.b16 %v159
    %v658 = vunpack.c.h.b16 %v159
    %v659 = vunpack.c.l.b16 %v160
    %v660 = vunpack.c.h.b16 %v160
    %v661 = vunpack.c.l.b16 %v161
    %v662 = vunpack.c.h.b16 %v161
    %v663 = vunpack.c.l.b16 %v162
    %v664 = vunpack.c.h.b16 %v162
    %v665 = vunpack.c.l.b16 %v163
    %v666 = vunpack.c.h.b16 %v163
    %v667 = vunpack.c.l.b16 %v164
    %v668 = vunpack.c.h.b16 %v164
    %v669 = vunpack.c.l.b16 %v165
    %v670 = vunpack.c.h.b16 %v165
    %v671 = vunpack.c.l.b16 %v166
    %v672 = vunpack.c.h.b16 %v166
    %v673 = vunpack.c.l.b16 %v167
    %v674 = vunpack.c.h.b16 %v167
    %v675 = vunpack.c.l.b16 %v168
    %v676 = vunpack.c.h.b16 %v168
    %v677 = vunpack.c.l.b16 %v169
    %v678 = vunpack.c.h.b16 %v169
    %v679 = vunpack.c.l.b16 %v170
    %v680 = vunpack.c.h.b16 %v170
    %v681 = vunpack.c.l.b16 %v171
    %v682 = vunpack.c.h.b16 %v171
    %v683 = vunpack.c.l.b16 %v172
    %v684 = vunpack.c.h.b16 %v172
    %v685 = vunpack.c.l.b16 %v173
    %v686 = vunpack.c.h.b16 %v173
    %v687 = vunpack.c.l.b16 %v174
    %v688 = vunpack.c.h.b16 %v174
    %v689 = vunpack.c.l.b16 %v175
    %v690 = vunpack.c.h.b16 %v175
    %v691 = vunpack.c.l.b16 %v176
    %v692 = vunpack.c.h.b16 %v176
    %v693 = vunpack.c.l.b16 %v177
    %v694 = vunpack.c.h.b16 %v177
    %v695 = vunpack.c.l.b16 %v178
    %v696 = vunpack.c.h.b16 %v178
    %v697 = vunpack.c.l.b16 %v179
    %v698 = vunpack.c.h.b16 %v179
    %v699 = vunpack.c.l.b16 %v180
    %v700 = vunpack.c.h.b16 %v180
    %v701 = vunpack.c.l.b16 %v181
    %v702 = vunpack.c.h.b16 %v181
    %v703 = vunpack.c.l.b16 %v182
    %v704 = vunpack.c.h.b16 %v182
    %v705 = vunpack.c.l.b16 %v183
    %v706 = vunpack.c.h.b16 %v183
    %v707 = vunpack.c.l.b16 %v184
    %v708 = vunpack.c.h.b16 %v184
    %v709 = vunpack.c.l.b16 %v185
    %v710 = vunpack.c.h.b16 %v185
    %v711 = vunpack.c.l.b16 %v186
    %v712 = vunpack.c.h.b16 %v186
    %v713 = vunpack.c.l.b16 %v187
    %v714 = vunpack.c.h.b16 %v187
    %v715 = vunpack.c.l.b16 %v188
    %v716 = vunpack.c.h.b16 %v188
    %v717 = vunpack.c.l.b16 %v189
    %v718 = vunpack.c.h.b16 %v189
    %v719 = vunpack.c.l.b16 %v190
    %v720 = vunpack.c.h.b16 %v190
    %v721 = vunpack.c.l.b16 %v191
    %v722 = vunpack.c.h.b16 %v191
    %v723 = vunpack.c.l.b16 %v192
    %v724 = vunpack.c.h.b16 %v192
    %v725 = vunpack.c.l.b16 %v193
    %v726 = vunpack.c.h.b16 %v193
    %v727 = vunpack.c.l.b16 %v194
    %v728 = vunpack.c.h.b16 %v194
    %v729 = vunpack.c.l.b16 %v195
    %v730 = vunpack.c.h.b16 %v195
    %v731 = vunpack.c.l.b16 %v196
    %v732 = vunpack.c.h.b16 %v196
    %v733 = vunpack.c.l.b16 %v197
    %v734 = vunpack.c.h.b16 %v197
    %v735 = vunpack.c.l.b16 %v198
    %v736 = vunpack.c.h.b16 %v198
    %v737 = vunpack.c.l.b16 %v199
    %v738 = vunpack.c.h.b16 %v199
    %v739 = vunpack.c.l.b16 %v200
    %v740 = vunpack.c.h.b16 %v200
    %v741 = vunpack.c.l.b16 %v201
    %v742 = vunpack.c.h.b16 %v201
    %v743 = vunpack.c.l.b16 %v202
    %v744 = vunpack.c.h.b16 %v202
    %v745 = vunpack.c.l.b16 %v203
    %v746 = vunpack.c.h.b16 %v203
    %v747 = vunpack.c.l.b16 %v204
    %v748 = vunpack.c.h.b16 %v204
    %v749 = vunpack.c.l.b16 %v205
    %v750 = vunpack.c.h.b16 %v205
    %v751 = vunpack.c.l.b16 %v206
    %v752 = vunpack.c.h.b16 %v206
    %v753 = vunpack.c.l.b16 %v207
    %v754 = vunpack.c.h.b16 %v207
    %v755 = vunpack.c.l.b16 %v208
    %v756 = vunpack.c.h.b16 %v208
    %v757 = vunpack.c.l.b16 %v209
    %v758 = vunpack.c.h.b16 %v209
    %v759 = vunpack.c.l.b16 %v210
    %v760 = vunpack.c.h.b16 %v210
    %v761 = vunpack.c.l.b16 %v211
    %v762 = vunpack.c.h.b16 %v211
    %v763 = vunpack.c.l.b16 %v212
    %v764 = vunpack.c.h.b16 %v212
    %v765 = vunpack.c.l.b16 %v213
    %v766 = vunpack.c.h.b16 %v213
    %v767 = vunpack.c.l.b16 %v214
    %v768 = vunpack.c.h.b16 %v214
    %v769 = vunpack.c.l.b16 %v215
    %v770 = vunpack.c.h.b16 %v215
    %v771 = vunpack.c.l.b16 %v216
    %v772 = vunpack.c.h.b16 %v216
    %v773 = vunpack.c.l.b16 %v217
    %v774 = vunpack.c.h.b16 %v217
    %v775 = vunpack.c.l.b16 %v218
    %v776 = vunpack.c.h.b16 %v218
    %v777 = vunpack.c.l.b16 %v219
    %v778 = vunpack.c.h.b16 %v219
    %v779 = vunpack.c.l.b16 %v220
    %v780 = vunpack.c.h.b16 %v220
    %v781 = vunpack.c.l.b16 %v221
    %v782 = vunpack.c.h.b16 %v221
    %v783 = vpack.c.b16 %v593, %v591
    %v784 = vpack.c.b16 %v594, %v592
    %v785 = vpack.c.b16 %v597, %v595
    %v786 = vpack.c.b16 %v598, %v596
    %v787 = vpack.c.b16 %v601, %v599
    %v788 = vpack.c.b16 %v602, %v600
    %v789 = vpack.c.b16 %v605, %v603
    %v790 = vpack.c.b16 %v606, %v604
    %v791 = vpack.c.b16 %v609, %v607
    %v792 = vpack.c.b16 %v610, %v608
    %v793 = vpack.c.b16 %v613, %v611
    %v794 = vpack.c.b16 %v614, %v612
    %v795 = vpack.c.b16 %v617, %v615
    %v796 = vpack.c.b16 %v618, %v616
    %v797 = vpack.c.b16 %v621, %v619
    %v798 = vpack.c.b16 %v622, %v620
    %v799 = vpack.c.b16 %v625, %v623
    %v800 = vpack.c.b16 %v626, %v624
    %v801 = vpack.c.b16 %v629, %v627
    %v802 = vpack.c.b16 %v630, %v628
    %v803 = vpack.c.b16 %v633, %v631
    %v804 = vpack.c.b16 %v634, %v632
    %v805 = vpack.c.b16 %v637, %v635
    %v806 = vpack.c.b16 %v638, %v636
    %v807 = vpack.c.b16 %v641, %v639
    %v808 = vpack.c.b16 %v642, %v640
    %v809 = vpack.c.b16 %v645, %v643
    %v810 = vpack.c.b16 %v646, %v644
    %v811 = vpack.c.b16 %v649, %v647
    %v812 = vpack.c.b16 %v650, %v648
    %v813 = vpack.c.b16 %v653, %v651
    %v814 = vpack.c.b16 %v654, %v652
    %v815 = vpack.c.b16 %v657, %v655
    %v816 = vpack.c.b16 %v658, %v656
    %v817 = vpack.c.b16 %v661, %v659
    %v818 = vpack.c.b16 %v662, %v660
    %v819 = vpack.c.b16 %v665, %v663
    %v820 = vpack.c.b16 %v666, %v664
    %v821 = vpack.c.b16 %v669, %v667
    %v822 = vpack.c.b16 %v670, %v668
    %v823 = vpack.c.b16 %v673, %v671
    %v824 = vpack.c.b16 %v674, %v672
    %v825 = vpack.c.b16 %v677, %v675
    %v826 = vpack.c.b16 %v678, %v676
    %v827 = vpack.c.b16 %v681, %v679
    %v828 = vpack.c.b16 %v682, %v680
    %v829 = vpack.c.b16 %v685, %v683
    %v830 = vpack.c.b16 %v686, %v684
    %v831 = vpack.c.b16 %v689, %v687
    %v832 = vpack.c.b16 %v690, %v688
    %v833 = vpack.c.b16 %v693, %v691
    %v834 = vpack.c.b16 %v694, %v692
    %v835 = vpack.c.b16 %v697, %v695
    %v836 = vpack.c.b16 %v698, %v696
    %v837 = vpack.c.b16 %v701, %v699
    %v838 = vpack.c.b16 %v702, %v700
    %v839 = vpack.c.b16 %v705, %v703
    %v840 = vpack.c.b16 %v706, %v704
    %v841 = vpack.c.b16 %v709, %v707
    %v842 = vpack.c.b16 %v710, %v708
    %v843 = vpack.c.b16 %v713, %v711
    %v844 = vpack.c.b16 %v714, %v712
    %v845 = vpack.c.b16 %v717, %v715
    %v846 = vpack.c.b16 %v718, %v716
    %v847 = vpack.c.b16 %v721, %v719
    %v848 = vpack.c.b16 %v722, %v720
    %v849 = vpack.c.b16 %v725, %v723
    %v850 = vpack.c.b16 %v726, %v724
    %v851 = vpack.c.b16 %v729, %v727
    %v852 = vpack.c.b16 %v730, %v728
    %v853 = vpack.c.b16 %v733, %v731
    %v854 = vpack.c.b16 %v734, %v732
    %v855 = vpack.c.b16 %v737, %v735
    %v856 = vpack.c.b16 %v738, %v736
    %v857 = vpack.c.b16 %v741, %v739
    %v858 = vpack.c.b16 %v742, %v740
    %v859 = vpack.c.b16 %v745, %v743
    %v860 = vpack.c.b16 %v746, %v744
    %v861 = vpack.c.b16 %v749, %v747
    %v862 = vpack.c.b16 %v750, %v748
    %v863 = vpack.c.b16 %v753, %v751
    %v864 = vpack.c.b16 %v754, %v752
    %v865 = vpack.c.b16 %v757, %v755
    %v866 = vpack.c.b16 %v758, %v756
    %v867 = vpack.c.b16 %v761, %v759
    %v868 = vpack.c.b16 %v762, %v760
    %v869 = vpack.c.b16 %v765, %v763
    %v870 = vpack.c.b16 %v766, %v764
    %v871 = vpack.c.b16 %v769, %v767
    %v872 = vpack.c.b16 %v770, %v768
    %v873 = vpack.c.b16 %v773, %v771
    %v874 = vpack.c.b16 %v774, %v772
    %v875 = vpack.c.b16 %v777, %v775
    %v876 = vpack.c.b16 %v778, %v776
    %v877 = vpack.c.b16 %v781, %v779
    %v878 = vpack.c.b16 %v782, %v780
    %975 = vmatpush.bf16.msra.mxu0 %v797
    %976 = vmatpush.bf16.msra.mxu0 %v795
    %977 = vmatpush.bf16.msra.mxu0 %v793
    %978 = vmatpush.bf16.msra.mxu0 %v791
    %979 = vmatpush.bf16.msra.mxu0 %v789
    %980 = vmatpush.bf16.msra.mxu0 %v787
    %981 = vmatpush.bf16.msra.mxu0 %v785
    %982 = vmatpush.bf16.msra.mxu0 %v783
    %983 = vmatmul.bf16.gmra.mxu0 %v483
    %v984 = vpop.f32.mrf.mxu0
    %v985 = vadd.f32 %v445, %v984
    %v986 = vpop.f32.mrf.mxu0
    %987 = vdwg.mxu0
    %988 = vmatpush.bf16.msra.mxu0 %v813
    %989 = vmatpush.bf16.msra.mxu0 %v811
    %990 = vmatpush.bf16.msra.mxu0 %v809
    %991 = vmatpush.bf16.msra.mxu0 %v807
    %992 = vmatpush.bf16.msra.mxu0 %v805
    %993 = vmatpush.bf16.msra.mxu0 %v803
    %994 = vmatpush.bf16.msra.mxu0 %v801
    %995 = vmatpush.bf16.msra.mxu0 %v799
    %996 = vmatmul.bf16.gmra.mxu0 %v484
    %v997 = vpop.f32.mrf.mxu0
    %v998 = vadd.f32 %v985, %v997
    %v999 = vpop.f32.mrf.mxu0
    %1000 = vdwg.mxu0
    %1001 = vmatpush.bf16.msra.mxu0 %v829
    %1002 = vmatpush.bf16.msra.mxu0 %v827
    %1003 = vmatpush.bf16.msra.mxu0 %v825
    %1004 = vmatpush.bf16.msra.mxu0 %v823
    %1005 = vmatpush.bf16.msra.mxu0 %v821
    %1006 = vmatpush.bf16.msra.mxu0 %v819
    %1007 = vmatpush.bf16.msra.mxu0 %v817
    %1008 = vmatpush.bf16.msra.mxu0 %v815
    %1009 = vmatmul.bf16.gmra.mxu0 %v485
    %v1010 = vpop.f32.mrf.mxu0
    %v1011 = vadd.f32 %v998, %v1010
    %v1012 = vpop.f32.mrf.mxu0
    %1013 = vdwg.mxu0
    %1014 = vmatpush.bf16.msra.mxu0 %v845
    %1015 = vmatpush.bf16.msra.mxu0 %v843
    %1016 = vmatpush.bf16.msra.mxu0 %v841
    %1017 = vmatpush.bf16.msra.mxu0 %v839
    %1018 = vmatpush.bf16.msra.mxu0 %v837
    %1019 = vmatpush.bf16.msra.mxu0 %v835
    %1020 = vmatpush.bf16.msra.mxu0 %v833
    %1021 = vmatpush.bf16.msra.mxu0 %v831
    %1022 = vmatmul.bf16.gmra.mxu0 %v486
    %v1023 = vpop.f32.mrf.mxu0
    %v1024 = vadd.f32 %v1011, %v1023
    %v1025 = vpop.f32.mrf.mxu0
    %1026 = vdwg.mxu0
    %1027 = vmatpush.bf16.msra.mxu0 %v861
    %1028 = vmatpush.bf16.msra.mxu0 %v859
    %1029 = vmatpush.bf16.msra.mxu0 %v857
    %1030 = vmatpush.bf16.msra.mxu0 %v855
    %1031 = vmatpush.bf16.msra.mxu0 %v853
    %1032 = vmatpush.bf16.msra.mxu0 %v851
    %1033 = vmatpush.bf16.msra.mxu0 %v849
    %1034 = vmatpush.bf16.msra.mxu0 %v847
    %1035 = vmatmul.bf16.gmra.mxu0 %v487
    %v1036 = vpop.f32.mrf.mxu0
    %v1037 = vadd.f32 %v1024, %v1036
    %v1038 = vpop.f32.mrf.mxu0
    %1039 = vdwg.mxu0
    %1040 = vmatpush.bf16.msra.mxu0 %v877
    %1041 = vmatpush.bf16.msra.mxu0 %v875
    %1042 = vmatpush.bf16.msra.mxu0 %v873
    %1043 = vmatpush.bf16.msra.mxu0 %v871
    %1044 = vmatpush.bf16.msra.mxu0 %v869
    %1045 = vmatpush.bf16.msra.mxu0 %v867
    %1046 = vmatpush.bf16.msra.mxu0 %v865
    %1047 = vmatpush.bf16.msra.mxu0 %v863
    %1048 = vmatmul.bf16.gmra.mxu0 %v488
    %v1049 = vpop.f32.mrf.mxu0
    %v1050 = vadd.f32 %v1037, %v1049
    %v1051 = vpop.f32.mrf.mxu0
    %1052 = vdwg.mxu0
    %1053 = vmatpush.bf16.msra.mxu0 %v798
    %1054 = vmatpush.bf16.msra.mxu0 %v796
    %1055 = vmatpush.bf16.msra.mxu0 %v794
    %1056 = vmatpush.bf16.msra.mxu0 %v792
    %1057 = vmatpush.bf16.msra.mxu0 %v790
    %1058 = vmatpush.bf16.msra.mxu0 %v788
    %1059 = vmatpush.bf16.msra.mxu0 %v786
    %1060 = vmatpush.bf16.msra.mxu0 %v784
    %1061 = vmatmul.bf16.gmra.mxu0 %v483
    %v1062 = vpop.f32.mrf.mxu0
    %v1063 = vadd.f32 %v471, %v1062
    %v1064 = vpop.f32.mrf.mxu0
    %1065 = vdwg.mxu0
    %1066 = vmatpush.bf16.msra.mxu0 %v814
    %1067 = vmatpush.bf16.msra.mxu0 %v812
    %1068 = vmatpush.bf16.msra.mxu0 %v810
    %1069 = vmatpush.bf16.msra.mxu0 %v808
    %1070 = vmatpush.bf16.msra.mxu0 %v806
    %1071 = vmatpush.bf16.msra.mxu0 %v804
    %1072 = vmatpush.bf16.msra.mxu0 %v802
    %1073 = vmatpush.bf16.msra.mxu0 %v800
    %1074 = vmatmul.bf16.gmra.mxu0 %v484
    %v1075 = vpop.f32.mrf.mxu0
    %v1076 = vadd.f32 %v1063, %v1075
    %v1077 = vpop.f32.mrf.mxu0
    %1078 = vdwg.mxu0
    %1079 = vmatpush.bf16.msra.mxu0 %v830
    %1080 = vmatpush.bf16.msra.mxu0 %v828
    %1081 = vmatpush.bf16.msra.mxu0 %v826
    %1082 = vmatpush.bf16.msra.mxu0 %v824
    %1083 = vmatpush.bf16.msra.mxu0 %v822
    %1084 = vmatpush.bf16.msra.mxu0 %v820
    %1085 = vmatpush.bf16.msra.mxu0 %v818
    %1086 = vmatpush.bf16.msra.mxu0 %v816
    %1087 = vmatmul.bf16.gmra.mxu0 %v485
    %v1088 = vpop.f32.mrf.mxu0
    %v1089 = vadd.f32 %v1076, %v1088
    %v1090 = vpop.f32.mrf.mxu0
    %1091 = vdwg.mxu0
    %1092 = vmatpush.bf16.msra.mxu0 %v846
    %1093 = vmatpush.bf16.msra.mxu0 %v844
    %1094 = vmatpush.bf16.msra.mxu0 %v842
    %1095 = vmatpush.bf16.msra.mxu0 %v840
    %1096 = vmatpush.bf16.msra.mxu0 %v838
    %1097 = vmatpush.bf16.msra.mxu0 %v836
    %1098 = vmatpush.bf16.msra.mxu0 %v834
    %1099 = vmatpush.bf16.msra.mxu0 %v832
    %1100 = vmatmul.bf16.gmra.mxu0 %v486
    %v1101 = vpop.f32.mrf.mxu0
    %v1102 = vadd.f32 %v1089, %v1101
    %v1103 = vpop.f32.mrf.mxu0
    %1104 = vdwg.mxu0
    %1105 = vmatpush.bf16.msra.mxu0 %v862
    %1106 = vmatpush.bf16.msra.mxu0 %v860
    %1107 = vmatpush.bf16.msra.mxu0 %v858
    %1108 = vmatpush.bf16.msra.mxu0 %v856
    %1109 = vmatpush.bf16.msra.mxu0 %v854
    %1110 = vmatpush.bf16.msra.mxu0 %v852
    %1111 = vmatpush.bf16.msra.mxu0 %v850
    %1112 = vmatpush.bf16.msra.mxu0 %v848
    %1113 = vmatmul.bf16.gmra.mxu0 %v487
    %v1114 = vpop.f32.mrf.mxu0
    %v1115 = vadd.f32 %v1102, %v1114
    %v1116 = vpop.f32.mrf.mxu0
    %1117 = vdwg.mxu0
    %1118 = vmatpush.bf16.msra.mxu0 %v878
    %1119 = vmatpush.bf16.msra.mxu0 %v876
    %1120 = vmatpush.bf16.msra.mxu0 %v874
    %1121 = vmatpush.bf16.msra.mxu0 %v872
    %1122 = vmatpush.bf16.msra.mxu0 %v870
    %1123 = vmatpush.bf16.msra.mxu0 %v868
    %1124 = vmatpush.bf16.msra.mxu0 %v866
    %1125 = vmatpush.bf16.msra.mxu0 %v864
    %1126 = vmatmul.bf16.gmra.mxu0 %v488
    %v1127 = vpop.f32.mrf.mxu0
    %v1128 = vadd.f32 %v1115, %v1127
    %v1129 = vpop.f32.mrf.mxu0
    %1130 = vdwg.mxu0
    %v1131 = vld [vmem:[%s4] sm:$0x3]
    %v1133 = vperm.slane %v1131, 0
    %v1134 = vperm.slane %v1131, 1
    %v1137 = vadd.f32 %v1050, %v1133
    %v1138 = vadd.f32 %v1128, %v1134
    %v1139 = vmax.f32 %v1137, 0.0
    %v1140 = vmax.f32 %v1138, 0.0
    %v1141 = vpack.c.bf16 %v1139, %v1139
    %v1142 = vpack.c.bf16 %v1140, %v1140
    %v1143 = vld [vmem:[#allocation10] sm:$0xf]
    %v1144 = vld [vmem:[#allocation10 + $0x4] sm:$0xf]
    %v1145 = vld [vmem:[#allocation10 + $0x8] sm:$0xf]
    %v1146 = vld [vmem:[#allocation10 + $0xc] sm:$0xf]
    %v1147 = vld [vmem:[#allocation10 + $0x10] sm:$0xf]
    %v1148 = vld [vmem:[#allocation10 + $0x14] sm:$0xf]
    %v1149 = vld [vmem:[#allocation10 + $0x18] sm:$0xf]
    %v1150 = vld [vmem:[#allocation10 + $0x1c] sm:$0xf]
    %v1151 = vld [vmem:[#allocation10 + $0x20] sm:$0xf]
    %v1152 = vld [vmem:[#allocation10 + $0x24] sm:$0xf]
    %v1153 = vld [vmem:[#allocation10 + $0x28] sm:$0xf]
    %v1154 = vld [vmem:[#allocation10 + $0x2c] sm:$0xf]
    %v1155 = vld [vmem:[#allocation10 + $0x30] sm:$0xf]
    %v1156 = vld [vmem:[#allocation10 + $0x34] sm:$0xf]
    %v1157 = vld [vmem:[#allocation10 + $0x38] sm:$0xf]
    %v1158 = vld [vmem:[#allocation10 + $0x3c] sm:$0xf]
    %v1159 = vld [vmem:[#allocation10 + $0x40] sm:$0xf]
    %v1160 = vld [vmem:[#allocation10 + $0x44] sm:$0xf]
    %v1161 = vld [vmem:[#allocation10 + $0x48] sm:$0xf]
    %v1162 = vld [vmem:[#allocation10 + $0x4c] sm:$0xf]
    %v1163 = vld [vmem:[#allocation10 + $0x50] sm:$0xf]
    %v1164 = vld [vmem:[#allocation10 + $0x54] sm:$0xf]
    %v1165 = vld [vmem:[#allocation10 + $0x58] sm:$0xf]
    %v1166 = vld [vmem:[#allocation10 + $0x5c] sm:$0xf]
    %v1167 = vld [vmem:[#allocation10 + $0x60] sm:$0xf]
    %v1168 = vld [vmem:[#allocation10 + $0x64] sm:$0xf]
    %v1169 = vld [vmem:[#allocation10 + $0x68] sm:$0xf]
    %v1170 = vld [vmem:[#allocation10 + $0x6c] sm:$0xf]
    %v1171 = vld [vmem:[#allocation10 + $0x70] sm:$0xf]
    %v1172 = vld [vmem:[#allocation10 + $0x74] sm:$0xf]
    %v1173 = vld [vmem:[#allocation10 + $0x78] sm:$0xf]
    %v1174 = vld [vmem:[#allocation10 + $0x7c] sm:$0xf]
    %v1175 = vld [vmem:[%s6] sm:$0x1]
    %v1177 = vperm.slane %v1175, 0
    %v1211 = vunpack.c.l.b16 %v1143
    %v1212 = vunpack.c.l.b16 %v1144
    %v1213 = vunpack.c.l.b16 %v1145
    %v1214 = vunpack.c.l.b16 %v1146
    %v1215 = vunpack.c.l.b16 %v1147
    %v1216 = vunpack.c.l.b16 %v1148
    %v1217 = vunpack.c.l.b16 %v1149
    %v1218 = vunpack.c.l.b16 %v1150
    %v1219 = vunpack.c.l.b16 %v1151
    %v1220 = vunpack.c.l.b16 %v1152
    %v1221 = vunpack.c.l.b16 %v1153
    %v1222 = vunpack.c.l.b16 %v1154
    %v1223 = vunpack.c.l.b16 %v1155
    %v1224 = vunpack.c.l.b16 %v1156
    %v1225 = vunpack.c.l.b16 %v1157
    %v1226 = vunpack.c.l.b16 %v1158
    %v1227 = vunpack.c.l.b16 %v1159
    %v1228 = vunpack.c.l.b16 %v1160
    %v1229 = vunpack.c.l.b16 %v1161
    %v1230 = vunpack.c.l.b16 %v1162
    %v1231 = vunpack.c.l.b16 %v1163
    %v1232 = vunpack.c.l.b16 %v1164
    %v1233 = vunpack.c.l.b16 %v1165
    %v1234 = vunpack.c.l.b16 %v1166
    %v1235 = vunpack.c.l.b16 %v1167
    %v1236 = vunpack.c.l.b16 %v1168
    %v1237 = vunpack.c.l.b16 %v1169
    %v1238 = vunpack.c.l.b16 %v1170
    %v1239 = vunpack.c.l.b16 %v1171
    %v1240 = vunpack.c.l.b16 %v1172
    %v1241 = vunpack.c.l.b16 %v1173
    %v1242 = vunpack.c.l.b16 %v1174
    %v1243 = vpack.c.b16 %v1212, %v1211
    %v1244 = vpack.c.b16 %v1214, %v1213
    %v1245 = vpack.c.b16 %v1216, %v1215
    %v1246 = vpack.c.b16 %v1218, %v1217
    %v1247 = vpack.c.b16 %v1220, %v1219
    %v1248 = vpack.c.b16 %v1222, %v1221
    %v1249 = vpack.c.b16 %v1224, %v1223
    %v1250 = vpack.c.b16 %v1226, %v1225
    %v1251 = vpack.c.b16 %v1228, %v1227
    %v1252 = vpack.c.b16 %v1230, %v1229
    %v1253 = vpack.c.b16 %v1232, %v1231
    %v1254 = vpack.c.b16 %v1234, %v1233
    %v1255 = vpack.c.b16 %v1236, %v1235
    %v1256 = vpack.c.b16 %v1238, %v1237
    %v1257 = vpack.c.b16 %v1240, %v1239
    %v1258 = vpack.c.b16 %v1242, %v1241
    %1275 = vmatpush.bf16.msra.mxu0 %v1250
    %1276 = vmatpush.bf16.msra.mxu0 %v1249
    %1277 = vmatpush.bf16.msra.mxu0 %v1248
    %1278 = vmatpush.bf16.msra.mxu0 %v1247
    %1279 = vmatpush.bf16.msra.mxu0 %v1246
    %1280 = vmatpush.bf16.msra.mxu0 %v1245
    %1281 = vmatpush.bf16.msra.mxu0 %v1244
    %1282 = vmatpush.bf16.msra.mxu0 %v1243
    %1283 = vmatmul.bf16.gmra.mxu0 %v1141
    %v1284 = vpop.f32.mrf.mxu0
    %v1285 = vadd.f32 %v1177, %v1284
    %v1286 = vpop.f32.mrf.mxu0
    %1287 = vdwg.mxu0
    %1288 = vmatpush.bf16.msra.mxu0 %v1258
    %1289 = vmatpush.bf16.msra.mxu0 %v1257
    %1290 = vmatpush.bf16.msra.mxu0 %v1256
    %1291 = vmatpush.bf16.msra.mxu0 %v1255
    %1292 = vmatpush.bf16.msra.mxu0 %v1254
    %1293 = vmatpush.bf16.msra.mxu0 %v1253
    %1294 = vmatpush.bf16.msra.mxu0 %v1252
    %1295 = vmatpush.bf16.msra.mxu0 %v1251
    %1296 = vmatmul.bf16.gmra.mxu0 %v1142
    %v1297 = vpop.f32.mrf.mxu0
    %v1298 = vadd.f32 %v1285, %v1297
    %v1299 = vpop.f32.mrf.mxu0
    %1300 = vdwg.mxu0
    %v1301 = vmax.f32 %v1298, 0.0
    %v1302 = vpack.c.bf16 %v1301, %v1301
    %v1303 = vld [vmem:[#allocation11] sm:$0xf]
    %v1304 = vld [vmem:[#allocation11 + $0x4] sm:$0xf]
    %v1305 = vld [vmem:[#allocation11 + $0x8] sm:$0xf]
    %v1306 = vld [vmem:[#allocation11 + $0xc] sm:$0xf]
    %v1307 = vld [vmem:[#allocation11 + $0x10] sm:$0xf]
    %v1308 = vld [vmem:[#allocation11 + $0x14] sm:$0xf]
    %v1309 = vld [vmem:[#allocation11 + $0x18] sm:$0xf]
    %v1310 = vld [vmem:[#allocation11 + $0x1c] sm:$0xf]
    %v1311 = vld [vmem:[#allocation11 + $0x20] sm:$0xf]
    %v1312 = vld [vmem:[#allocation11 + $0x24] sm:$0xf]
    %v1313 = vld [vmem:[#allocation11 + $0x28] sm:$0xf]
    %v1314 = vld [vmem:[#allocation11 + $0x2c] sm:$0xf]
    %v1315 = vld [vmem:[#allocation11 + $0x30] sm:$0xf]
    %v1316 = vld [vmem:[#allocation11 + $0x34] sm:$0xf]
    %v1317 = vld [vmem:[#allocation11 + $0x38] sm:$0xf]
    %v1318 = vld [vmem:[#allocation11 + $0x3c] sm:$0xf]
    %v1319 = vld [vmem:[%s8] sm:$0x1]
    %v1321 = vperm.slane %v1319, 0
    %v1339 = vunpack.c.l.b16 %v1303
    %v1340 = vunpack.c.l.b16 %v1304
    %v1341 = vunpack.c.l.b16 %v1305
    %v1342 = vunpack.c.l.b16 %v1306
    %v1343 = vunpack.c.l.b16 %v1307
    %v1344 = vunpack.c.l.b16 %v1308
    %v1345 = vunpack.c.l.b16 %v1309
    %v1346 = vunpack.c.l.b16 %v1310
    %v1347 = vunpack.c.l.b16 %v1311
    %v1348 = vunpack.c.l.b16 %v1312
    %v1349 = vunpack.c.l.b16 %v1313
    %v1350 = vunpack.c.l.b16 %v1314
    %v1351 = vunpack.c.l.b16 %v1315
    %v1352 = vunpack.c.l.b16 %v1316
    %v1353 = vunpack.c.l.b16 %v1317
    %v1354 = vunpack.c.l.b16 %v1318
    %v1355 = vpack.c.b16 %v1340, %v1339
    %v1356 = vpack.c.b16 %v1342, %v1341
    %v1357 = vpack.c.b16 %v1344, %v1343
    %v1358 = vpack.c.b16 %v1346, %v1345
    %v1359 = vpack.c.b16 %v1348, %v1347
    %v1360 = vpack.c.b16 %v1350, %v1349
    %v1361 = vpack.c.b16 %v1352, %v1351
    %v1362 = vpack.c.b16 %v1354, %v1353
    %1371 = vmatpush.bf16.msra.mxu0 %v1362
    %1372 = vmatpush.bf16.msra.mxu0 %v1361
    %1373 = vmatpush.bf16.msra.mxu0 %v1360
    %1374 = vmatpush.bf16.msra.mxu0 %v1359
    %1375 = vmatpush.bf16.msra.mxu0 %v1358
    %1376 = vmatpush.bf16.msra.mxu0 %v1357
    %1377 = vmatpush.bf16.msra.mxu0 %v1356
    %1378 = vmatpush.bf16.msra.mxu0 %v1355
    %1379 = vmatmul.bf16.gmra.mxu0 %v1302
    %v1380 = vpop.f32.mrf.mxu0
    %v1381 = vadd.f32 %v1321, %v1380
    %v1382 = vpop.f32.mrf.mxu0
    %1383 = vdwg.mxu0
    %1384 = vst [vmem:[#allocation13] sm:$0xff] %v1381
    // Predicated region
    $region62: #{tpu_custom_call.1} parent=1 // pred_check
      _
    $region63: #{tpu_custom_call.1} parent=1 // pred_check_branch
      %1386 = sbr.rel (0) target = $region65
    $region64: #{tpu_custom_call.1} parent=1 // pred_region
      %1388 = vsyncadd [#allocation4], 0
      %s1390 = sshll.u32 [#allocation13], 4
      %s1391 = int_to_ptr.vmem [resolvable:$true] %s1390
      %s1392 = sshll.u32 %s9, 4
      %s1393 = int_to_ptr.hbm [resolvable:$true] %s1392
      %1395 = dma.vmem_to_hbm [thread:$0]  %s1391, 128, %s1393, [#allocation4]
    $region65: #{tpu_custom_call.1} parent=1 // pred_fallthru
      _
    // Predicated region
    $region66: #{tpu_custom_call.1} parent=1 // pred_check
      _
    $region67: #{tpu_custom_call.1} parent=1 // pred_check_branch
      %1397 = sbr.rel (0) target = $region69
    $region68: #{tpu_custom_call.1} parent=1 // pred_region
      %1399 = dma.done [#allocation4], 128
    $region69: #{tpu_custom_call.1} parent=1 // pred_fallthru
      _
    %1400 = vsyncpa [#allocation3], 1
    %1401 = vsyncpa [#allocation6], 1
    %1402 = vsyncpa [#allocation9], 1
    %1403 = vsyncpa [#allocation12], 1
    %1404 = vsyncpa [#allocation4], 1

</llo_original>
